<compile_context>
chip_gen: v7x
topology: tpu7x:2x2x1
jax: 0.10.0
libtpu: 0.0.40
codegen_flags: <defaults>
</compile_context>

<pallas_src>
import functools
import math

import jax
import jax.numpy as jnp
from jax.experimental import pallas as pl
from jax.experimental.pallas import tpu as pltpu

LANE = 128


def _charge(v, xt, inv_tau, v_reset):
    """decay_input=True charge update: v += (x - (v - v_reset)) * (1/tau) in f32."""
    if v_reset == 0.0:
        return v + (xt - v) * inv_tau            # fold out the dead (v - 0) subtract
    return v + (xt - (v - jnp.float32(v_reset))) * inv_tau


def _lif_kernel(x_ref, spk_ref, v_ref, *, t_blk, inv_tau, v_threshold, v_reset):
    """One (T_BLK, TILE_R, 128) block.  v_ref: f32 VMEM scratch carried across T-blocks."""
    tb = pl.program_id(1)

    @pl.when(tb == 0)
    def _init():
        v_ref[...] = jnp.full_like(v_ref, v_reset)

    v = v_ref[...]                                # load scratch once per T-block
    for t in range(t_blk):                        # static unroll; v carried in vregs
        xt = x_ref[t].astype(jnp.float32)         # recurrence always in f32
        v = _charge(v, xt, inv_tau, v_reset)
        spiked = v >= v_threshold                 # spike BEFORE reset
        spk_ref[t] = spiked.astype(spk_ref.dtype)
        v = jnp.where(spiked, jnp.float32(v_reset), v)   # hard reset
    v_ref[...] = v                                # store scratch once per T-block


@functools.partial(
    jax.jit, static_argnames=("tau", "v_threshold", "v_reset", "tile_r", "t_blk")
)
def lif_forward(x, *, tau=2.0, v_threshold=1.0, v_reset=0.0, tile_r=2048, t_blk=4):
    """Multi-step LIF forward.  x: [T, ...] -> spikes, same shape/dtype."""
    orig_shape = x.shape
    T = orig_shape[0]
    N = math.prod(orig_shape[1:])
    itemsize = jnp.dtype(x.dtype).itemsize
    # Packed sublane granularity of the input/output blocks (f32: 8, bf16: 16, int8: 32).
    sub = max(8, 32 // itemsize)

    rows = pl.cdiv(N, LANE)
    pad_lanes = rows * LANE - N

    t_blk = max(1, min(t_blk, T))

    # Row-tile size: full extent when it fits in one tile, else a multiple of `sub`
    # (ragged last tile handled by Pallas).
    if tile_r >= rows:
        tile_r = rows
    else:
        tile_r = max(sub, (tile_r // sub) * sub)

    # v7x: keep >=2 row tiles so both TensorCores get work on the "parallel" axis.
    if pl.cdiv(rows, tile_r) == 1 and rows >= 2 * sub:
        tile_r = pl.cdiv(pl.cdiv(rows, 2), sub) * sub

    # Cap live VMEM (2x input bufs + 2x output bufs + f32 v scratch); v7x has 64 MiB/TC.
    budget = 34 * 1024 * 1024

    def _vmem_bytes(tr, tb_):
        return 4 * tb_ * tr * LANE * itemsize + tr * LANE * 4

    while _vmem_bytes(tile_r, t_blk) > budget and tile_r > sub:
        tile_r = max(sub, (tile_r // 2 // sub) * sub)
    while _vmem_bytes(tile_r, t_blk) > budget and t_blk > 1:
        t_blk = max(1, t_blk // 2)

    # Lane-dense layout: pad only to a whole number of 128-lane columns (often a no-op).
    x_flat = x.reshape(T, N)
    if pad_lanes:
        x_flat = jnp.pad(x_flat, ((0, 0), (0, pad_lanes)))
    x3 = x_flat.reshape(T, rows, LANE)

    kernel = functools.partial(
        _lif_kernel,
        t_blk=t_blk,
        inv_tau=float(1.0 / tau),
        v_threshold=float(v_threshold),
        v_reset=float(v_reset),
    )
    block = (t_blk, tile_r, LANE)
    grid = (pl.cdiv(rows, tile_r), pl.cdiv(T, t_blk))   # T last: sequential recurrence

    spk3 = pl.pallas_call(
        kernel,
        out_shape=jax.ShapeDtypeStruct((T, rows, LANE), x.dtype),
        grid_spec=pltpu.PrefetchScalarGridSpec(
            num_scalar_prefetch=0,
            grid=grid,
            in_specs=[pl.BlockSpec(block, lambda r, tb: (tb, r, 0))],
            out_specs=pl.BlockSpec(block, lambda r, tb: (tb, r, 0)),
            scratch_shapes=[pltpu.VMEM((tile_r, LANE), jnp.float32)],
        ),
        compiler_params=pltpu.CompilerParams(
            dimension_semantics=("parallel", "arbitrary"),
            vmem_limit_bytes=40 * 1024 * 1024,   # explicit; legal on v5e/v6e/v7x
        ),
    )(x3)

    if pad_lanes:
        return spk3.reshape(T, rows * LANE)[:, :N].reshape(orig_shape)
    return spk3.reshape(orig_shape)


def lif_reference(x, tau=2.0, v_threshold=1.0, v_reset=0.0):
    """Pure-JAX reference (identical f32 math: mul by 1/tau, spike-before-reset, hard reset)."""
    inv_tau = float(1.0 / tau)
    xf = x.astype(jnp.float32)

    def step(v, xt):
        v = _charge(v, xt, inv_tau, v_reset)
        spk = v >= v_threshold
        v = jnp.where(spk, jnp.float32(v_reset), v)
        return v, spk.astype(x.dtype)

    v0 = jnp.full(x.shape[1:], v_reset, jnp.float32)
    _, spikes = jax.lax.scan(step, v0, xf)
    return spikes


if __name__ == "__main__":
    key = jax.random.PRNGKey(0)
    T, B, C, H, W = 4, 2, 4, 16, 16
    x = 1.5 * jax.random.normal(key, (T, B, C, H, W), dtype=jnp.float32)

    spikes = jax.block_until_ready(lif_forward(x))

    assert spikes.shape == x.shape and spikes.dtype == x.dtype
    ref = jax.block_until_ready(lif_reference(x))
    if not bool(jnp.array_equal(spikes, ref)):
        raise AssertionError("Pallas LIF kernel does not match pure-JAX reference")

    print("KERNEL_OK")
</pallas_src>

<mosaic_0001>
module attributes {stable_mosaic.version = 11 : i64} {
  func.func @_lif_kernel(%arg0: i32, %arg1: i32, %arg2: memref<4x8x128xf32, #tpu.memory_space<vmem>>, %arg3: memref<4x8x128xf32, #tpu.memory_space<vmem>>, %arg4: memref<8x128xf32, #tpu.memory_space<vmem>>) attributes {dimension_semantics = [#tpu.dimension_semantics<parallel>, #tpu.dimension_semantics<arbitrary>], iteration_bounds = array<i64: 2, 1>, scalar_prefetch = 0 : i64, scratch_operands = 1 : i64, tpu.core_type = #tpu.core_type<tc>, window_params = [{transform_indices = @transform_0, window_bounds = array<i64: 4, 8, 128>}, {transform_indices = @transform_1, window_bounds = array<i64: 4, 8, 128>}]} {
    %c0_i32 = arith.constant 0 : i32
    %0 = arith.cmpi eq, %arg1, %c0_i32 : i32
    %1 = arith.extui %0 : i1 to i32
    %c0_i32_0 = arith.constant 0 : i32
    %2 = arith.cmpi ne, %1, %c0_i32_0 : i32
    scf.if %2 {
      %cst_36 = arith.constant 0.000000e+00 : f32
      %65 = vector.broadcast %cst_36 : f32 to vector<8x128xf32>
      %c0_37 = arith.constant 0 : index
      %c0_38 = arith.constant 0 : index
      %66 = vector.load %arg4[%c0_37, %c0_38] : memref<8x128xf32, #tpu.memory_space<vmem>>, vector<8x128xf32>
      tpu.vector_store %arg4[%c0_37, %c0_38], %65 {strides = array<i32>} : memref<8x128xf32, #tpu.memory_space<vmem>>, vector<8x128xf32>,
    } else {
    }
    %c0 = arith.constant 0 : index
    %c0_1 = arith.constant 0 : index
    %3 = vector.load %arg4[%c0, %c0_1] : memref<8x128xf32, #tpu.memory_space<vmem>>, vector<8x128xf32>
    %c0_2 = arith.constant 0 : index
    %c0_3 = arith.constant 0 : index
    %c0_4 = arith.constant 0 : index
    %4 = vector.load %arg2[%c0_2, %c0_3, %c0_4] : memref<4x8x128xf32, #tpu.memory_space<vmem>>, vector<1x8x128xf32>
    %5 = vector.shape_cast %4 : vector<1x8x128xf32> to vector<8x128xf32>
    %6 = arith.subf %5, %3 : vector<8x128xf32>
    %cst = arith.constant 5.000000e-01 : f32
    %7 = vector.broadcast %cst : f32 to vector<8x128xf32>
    %8 = arith.mulf %6, %7 : vector<8x128xf32>
    %9 = arith.addf %3, %8 : vector<8x128xf32>
    %cst_5 = arith.constant 1.000000e+00 : f32
    %10 = vector.broadcast %cst_5 : f32 to vector<8x128xf32>
    %11 = arith.cmpf oge, %9, %10 : vector<8x128xf32>
    %12 = arith.extui %11 : vector<8x128xi1> to vector<8x128xi32>
    %13 = arith.sitofp %12 : vector<8x128xi32> to vector<8x128xf32>
    %c0_6 = arith.constant 0 : index
    %c0_7 = arith.constant 0 : index
    %c0_8 = arith.constant 0 : index
    %14 = vector.load %arg3[%c0_6, %c0_7, %c0_8] : memref<4x8x128xf32, #tpu.memory_space<vmem>>, vector<1x8x128xf32>
    %15 = vector.shape_cast %14 : vector<1x8x128xf32> to vector<8x128xf32>
    %16 = vector.shape_cast %13 : vector<8x128xf32> to vector<1x8x128xf32>
    tpu.vector_store %arg3[%c0_6, %c0_7, %c0_8], %16 {strides = array<i32>} : memref<4x8x128xf32, #tpu.memory_space<vmem>>, vector<1x8x128xf32>,
    %cst_9 = arith.constant 0.000000e+00 : f32
    %17 = vector.broadcast %cst_9 : f32 to vector<8x128xf32>
    %18 = arith.select %11, %17, %9 : vector<8x128xi1>, vector<8x128xf32>
    %c1 = arith.constant 1 : index
    %c0_10 = arith.constant 0 : index
    %c0_11 = arith.constant 0 : index
    %19 = vector.load %arg2[%c1, %c0_10, %c0_11] : memref<4x8x128xf32, #tpu.memory_space<vmem>>, vector<1x8x128xf32>
    %20 = vector.shape_cast %19 : vector<1x8x128xf32> to vector<8x128xf32>
    %21 = arith.subf %20, %18 : vector<8x128xf32>
    %cst_12 = arith.constant 5.000000e-01 : f32
    %22 = vector.broadcast %cst_12 : f32 to vector<8x128xf32>
    %23 = arith.mulf %21, %22 : vector<8x128xf32>
    %24 = arith.addf %18, %23 : vector<8x128xf32>
    %cst_13 = arith.constant 1.000000e+00 : f32
    %25 = vector.broadcast %cst_13 : f32 to vector<8x128xf32>
    %26 = arith.cmpf oge, %24, %25 : vector<8x128xf32>
    %27 = arith.extui %26 : vector<8x128xi1> to vector<8x128xi32>
    %28 = arith.sitofp %27 : vector<8x128xi32> to vector<8x128xf32>
    %c1_14 = arith.constant 1 : index
    %c0_15 = arith.constant 0 : index
    %c0_16 = arith.constant 0 : index
    %29 = vector.load %arg3[%c1_14, %c0_15, %c0_16] : memref<4x8x128xf32, #tpu.memory_space<vmem>>, vector<1x8x128xf32>
    %30 = vector.shape_cast %29 : vector<1x8x128xf32> to vector<8x128xf32>
    %31 = vector.shape_cast %28 : vector<8x128xf32> to vector<1x8x128xf32>
    tpu.vector_store %arg3[%c1_14, %c0_15, %c0_16], %31 {strides = array<i32>} : memref<4x8x128xf32, #tpu.memory_space<vmem>>, vector<1x8x128xf32>,
    %cst_17 = arith.constant 0.000000e+00 : f32
    %32 = vector.broadcast %cst_17 : f32 to vector<8x128xf32>
    %33 = arith.select %26, %32, %24 : vector<8x128xi1>, vector<8x128xf32>
    %c2 = arith.constant 2 : index
    %c0_18 = arith.constant 0 : index
    %c0_19 = arith.constant 0 : index
    %34 = vector.load %arg2[%c2, %c0_18, %c0_19] : memref<4x8x128xf32, #tpu.memory_space<vmem>>, vector<1x8x128xf32>
    %35 = vector.shape_cast %34 : vector<1x8x128xf32> to vector<8x128xf32>
    %36 = arith.subf %35, %33 : vector<8x128xf32>
    %cst_20 = arith.constant 5.000000e-01 : f32
    %37 = vector.broadcast %cst_20 : f32 to vector<8x128xf32>
    %38 = arith.mulf %36, %37 : vector<8x128xf32>
    %39 = arith.addf %33, %38 : vector<8x128xf32>
    %cst_21 = arith.constant 1.000000e+00 : f32
    %40 = vector.broadcast %cst_21 : f32 to vector<8x128xf32>
    %41 = arith.cmpf oge, %39, %40 : vector<8x128xf32>
    %42 = arith.extui %41 : vector<8x128xi1> to vector<8x128xi32>
    %43 = arith.sitofp %42 : vector<8x128xi32> to vector<8x128xf32>
    %c2_22 = arith.constant 2 : index
    %c0_23 = arith.constant 0 : index
    %c0_24 = arith.constant 0 : index
    %44 = vector.load %arg3[%c2_22, %c0_23, %c0_24] : memref<4x8x128xf32, #tpu.memory_space<vmem>>, vector<1x8x128xf32>
    %45 = vector.shape_cast %44 : vector<1x8x128xf32> to vector<8x128xf32>
    %46 = vector.shape_cast %43 : vector<8x128xf32> to vector<1x8x128xf32>
    tpu.vector_store %arg3[%c2_22, %c0_23, %c0_24], %46 {strides = array<i32>} : memref<4x8x128xf32, #tpu.memory_space<vmem>>, vector<1x8x128xf32>,
    %cst_25 = arith.constant 0.000000e+00 : f32
    %47 = vector.broadcast %cst_25 : f32 to vector<8x128xf32>
    %48 = arith.select %41, %47, %39 : vector<8x128xi1>, vector<8x128xf32>
    %c3 = arith.constant 3 : index
    %c0_26 = arith.constant 0 : index
    %c0_27 = arith.constant 0 : index
    %49 = vector.load %arg2[%c3, %c0_26, %c0_27] : memref<4x8x128xf32, #tpu.memory_space<vmem>>, vector<1x8x128xf32>
    %50 = vector.shape_cast %49 : vector<1x8x128xf32> to vector<8x128xf32>
    %51 = arith.subf %50, %48 : vector<8x128xf32>
    %cst_28 = arith.constant 5.000000e-01 : f32
    %52 = vector.broadcast %cst_28 : f32 to vector<8x128xf32>
    %53 = arith.mulf %51, %52 : vector<8x128xf32>
    %54 = arith.addf %48, %53 : vector<8x128xf32>
    %cst_29 = arith.constant 1.000000e+00 : f32
    %55 = vector.broadcast %cst_29 : f32 to vector<8x128xf32>
    %56 = arith.cmpf oge, %54, %55 : vector<8x128xf32>
    %57 = arith.extui %56 : vector<8x128xi1> to vector<8x128xi32>
    %58 = arith.sitofp %57 : vector<8x128xi32> to vector<8x128xf32>
    %c3_30 = arith.constant 3 : index
    %c0_31 = arith.constant 0 : index
    %c0_32 = arith.constant 0 : index
    %59 = vector.load %arg3[%c3_30, %c0_31, %c0_32] : memref<4x8x128xf32, #tpu.memory_space<vmem>>, vector<1x8x128xf32>
    %60 = vector.shape_cast %59 : vector<1x8x128xf32> to vector<8x128xf32>
    %61 = vector.shape_cast %58 : vector<8x128xf32> to vector<1x8x128xf32>
    tpu.vector_store %arg3[%c3_30, %c0_31, %c0_32], %61 {strides = array<i32>} : memref<4x8x128xf32, #tpu.memory_space<vmem>>, vector<1x8x128xf32>,
    %cst_33 = arith.constant 0.000000e+00 : f32
    %62 = vector.broadcast %cst_33 : f32 to vector<8x128xf32>
    %63 = arith.select %56, %62, %54 : vector<8x128xi1>, vector<8x128xf32>
    %c0_34 = arith.constant 0 : index
    %c0_35 = arith.constant 0 : index
    %64 = vector.load %arg4[%c0_34, %c0_35] : memref<8x128xf32, #tpu.memory_space<vmem>>, vector<8x128xf32>
    tpu.vector_store %arg4[%c0_34, %c0_35], %63 {strides = array<i32>} : memref<8x128xf32, #tpu.memory_space<vmem>>, vector<8x128xf32>,
    return
  }
  func.func @transform_0(%arg0: i32, %arg1: i32) -> (i32, i32, i32) {
    %c0_i32 = arith.constant 0 : i32
    %c0_i32_0 = arith.constant 0 : i32
    return %arg1, %arg0, %c0_i32 : i32, i32, i32
  }
  func.func @transform_1(%arg0: i32, %arg1: i32) -> (i32, i32, i32) {
    %c0_i32 = arith.constant 0 : i32
    %c0_i32_0 = arith.constant 0 : i32
    return %arg1, %arg0, %c0_i32 : i32, i32, i32
  }
}

</mosaic_0001>

<llo_original>
// kernel: lif_forward.1
$region0: #{lif_forward.1}
  #allocation0 [shape = 'u32[]', space=smem, size = 0x4, offset = 0x4, fixed_abs, tag = 'smem constant byte address 0x4 - core index']
  #allocation1 [shape = 'u32[144,128]{1,0:T(1,128)}', space=vmem, size = 0x12000, scoped, tag = 'internal scratch']
  #allocation2 [shape = 'f32[8,128]{1,0:T(8,128)}', space=vmem, size = 0x1000, scoped, tag = 'scratch operand']
  %s0 = inlined_call_operand.vmem [shape: f32[4,16,128], index: 0, kind: input, shape index: {}]
  %s1 = inlined_call_operand.vmem [shape: f32[4,16,128], index: 1, kind: output, shape index: {}]
  %s2 = sld [smem:[#allocation0]]
  $region113: #{lif_forward.1} parent=0
    _
  %s4 = ssub.s32 1, %s2
  %s5 = scalar_select 0, %s4, %s2
  $region1: #{lif_forward.1} parent=0
    #allocation3 [shape = 'u8[32768]{0}', space=vmem, size = 0x8000, scoped, tag = 'input window, operand 0']
    #allocation4 [shape = 'u8[32768]{0}', space=vmem, size = 0x8000, scoped, tag = 'output window, operand 0']
    loop: start=0, step=1, limit=4
    $region2: #{lif_forward.1} parent=1 // loop_pre_header
      _
    $region3: #{lif_forward.1} parent=1 // loop_header
      %s7 = sphi 0, %s11
      %p8 = scmp.ge.s32.totalorder %s7, 4
      %s14 = sphi 0, %s26
      %s15 = sphi 0, %s22
      %s16 = sphi 0, %s14
      %s17 = sphi 0, %s15
      %s18 = sphi 0, %s16
      %s19 = sphi 0, %s17
      %s31 = sphi 0, %s33
      %s34 = sphi 0, %s31
      %s35 = sphi 0, %s34
      %s51 = sphi 0, %s35
      %s59 = sphi 0, %s61
      %s62 = sphi 0, %s59
      %s63 = sphi 0, %s62
      %s79 = sphi 0, %s63
    $region4: #{lif_forward.1} parent=1 // loop_header_branch
      %10 = sbr.rel (%p8) target = $region8
    $region5: #{lif_forward.1} parent=1 // loop_body
      %s12 = ssub.s32 %s7, 1
      %s13 = ssub.s32 %s7, 2
      %s20 = sadd.s32 1, %s15
      %p21 = scmp.ge.s32.totalorder %s20, 1
      %s22 = scalar_select %p21, 0, %s20
      %s23 = sadd.s32 1, %s14
      %s24 = scalar_select %p21, %s23, %s14
      %p25 = scmp.ge.s32.totalorder %s24, 2
      %s26 = scalar_select %p25, 0, %s24
      %s27 = ssub.s32 %s15, %s22
      %s28 = ssub.s32 %s14, %s26
      %s29 = sor.u32 %s27, %s28
      %p30 = scmp.eq.s32.totalorder %s29, 0
      %s32 = sadd.s32 %s31, 1
      %s33 = scalar_select %p30, %s31, %s32
      %p36 = pneg %p30
      %p37 = scmp.eq.s32.totalorder %s7, 1
      %p38 = por %p36, %p37
      %p39 = scmp.ne.s32.totalorder %s31, %s34
      %p40 = scmp.eq.s32.totalorder %s7, 0
      %p41 = por %p39, %p40
      %p42 = scmp.ne.s32.totalorder %s31, %s34
      %p43 = scmp.eq.s32.totalorder %s12, 1
      %p44 = por %p42, %p43
      %p45 = scmp.ne.s32.totalorder %s34, %s35
      %p46 = scmp.eq.s32.totalorder %s12, 0
      %p47 = por %p45, %p46
      %p48 = scmp.ne.s32.totalorder %s34, %s35
      %p49 = scmp.eq.s32.totalorder %s13, 1
      %p50 = por %p48, %p49
      %p52 = scmp.ne.s32.totalorder %s35, %s51
      %p53 = scmp.eq.s32.totalorder %s13, 0
      %p54 = por %p52, %p53
      %s55 = ssub.s32 %s15, %s22
      %s56 = ssub.s32 %s14, %s26
      %s57 = sor.u32 %s55, %s56
      %p58 = scmp.eq.s32.totalorder %s57, 0
      %s60 = sadd.s32 %s59, 1
      %s61 = scalar_select %p58, %s59, %s60
      %p64 = pneg %p58
      %p65 = scmp.eq.s32.totalorder %s7, 1
      %p66 = por %p64, %p65
      %p67 = scmp.ne.s32.totalorder %s59, %s62
      %p68 = scmp.eq.s32.totalorder %s7, 0
      %p69 = por %p67, %p68
      %p70 = scmp.ne.s32.totalorder %s59, %s62
      %p71 = scmp.eq.s32.totalorder %s12, 1
      %p72 = por %p70, %p71
      %p73 = scmp.ne.s32.totalorder %s62, %s63
      %p74 = scmp.eq.s32.totalorder %s12, 0
      %p75 = por %p73, %p74
      %p76 = scmp.ne.s32.totalorder %s62, %s63
      %p77 = scmp.eq.s32.totalorder %s13, 1
      %p78 = por %p76, %p77
      %p80 = scmp.ne.s32.totalorder %s63, %s79
      %p81 = scmp.eq.s32.totalorder %s13, 0
      %p82 = por %p80, %p81
      %p83 = scmp.le.s32.totalorder 1, %s7
      %p84 = scmp.lt.s32.totalorder %s7, 3
      %p85 = pnand %p83, %p84
      %p86 = pneg %p85
      // Predicated region
      $region9: #{lif_forward.1} parent=5 // pred_check
        _
      $region10: #{lif_forward.1} parent=5 // pred_check_branch
        %88 = sbr.rel (%p85) target = $region12
      $region11: #{lif_forward.1} parent=5 // pred_region
        %s89 = ssub.s32 %s7, 1
      $region12: #{lif_forward.1} parent=5 // pred_fallthru
        _
      %p90 = scmp.lt.s32.totalorder %s7, 2
      // Predicated region
      $region13: #{lif_forward.1} parent=5 // pred_check
        %p91 = pneg %p90
      $region14: #{lif_forward.1} parent=5 // pred_check_branch
        %93 = sbr.rel (%p91) target = $region16
      $region15: #{lif_forward.1} parent=5 // pred_region
        // Predicated region
        $region17: #{lif_forward.1} parent=15 // pred_check
          %p94 = pneg %p41
        $region18: #{lif_forward.1} parent=15 // pred_check_branch
          %96 = sbr.rel (%p94) target = $region20
        $region19: #{lif_forward.1} parent=15 // pred_region
          %s97 = sand.u32 %s31, 1
          %s98 = sand.u32 %s31, 1
          %s99 = smul.addr %s98, 32
          %s100 = scalar_lea.vmem [#allocation3], %s99
          %s101 = smul.u32 4, %s15
          %s102 = smul.addr %s101, 2
          %s103 = sadd.s32 %s14, %s102
          %s104 = smul.addr %s103, 8
          %s105 = scalar_lea.vmem %s0, %s104
          // Predicated region
          $region21: #{lif_forward.1} parent=19 // pred_check
            _
          $region22: #{lif_forward.1} parent=19 // pred_check_branch
            %107 = sbr.rel (0) target = $region24
          $region23: #{lif_forward.1} parent=19 // pred_region
            // Predicated region
            $region25: #{lif_forward.1} parent=23 // pred_check
              _
            $region26: #{lif_forward.1} parent=23 // pred_check_branch
              %109 = sbr.rel (0) target = $region28
            $region27: #{lif_forward.1} parent=23 // pred_region
              // Predicated region
              $region40: #{lif_forward.1} parent=27 // pred_check
                _
              $region41: #{lif_forward.1} parent=27 // pred_check_branch
                %130 = sbr.rel (0) target = $region43
              $region42: #{lif_forward.1} parent=27 // pred_region
                loop: start=0, step=1, limit=1
                $region44: #{lif_forward.1} parent=42 // loop_pre_header
                  _
                $region45: #{lif_forward.1} parent=42 // loop_header
                  %s132 = sphi 0, %s136
                  %p133 = scmp.ge.s32.totalorder %s132, 1
                  %s137 = sphi %s105, %s105
                  %s138 = sphi %s100, %s100
                $region46: #{lif_forward.1} parent=42 // loop_header_branch
                  %135 = sbr.rel (%p133) target = $region50
                $region47: #{lif_forward.1} parent=42 // loop_body
                  %v139 = vld [vmem:[%s137] sm:$0xff]
                  %140 = vst [vmem:[%s138] sm:$0xff] %v139
                  %v141 = vld [vmem:[%s137 + $0x10] sm:$0xff]
                  %142 = vst [vmem:[%s138 + $0x8] sm:$0xff] %v141
                  %v143 = vld [vmem:[%s137 + $0x20] sm:$0xff]
                  %144 = vst [vmem:[%s138 + $0x10] sm:$0xff] %v143
                  %v145 = vld [vmem:[%s137 + $0x30] sm:$0xff]
                  %146 = vst [vmem:[%s138 + $0x18] sm:$0xff] %v145
                $region48: #{lif_forward.1} parent=42 // loop_footer
                  %s136 = sadd.s32 1, %s132
                $region49: #{lif_forward.1} parent=42 // loop_footer_branch
                  %131 = sbr.rel target = $region45
                $region50: #{lif_forward.1} parent=42 // loop_exit
                  _
              $region43: #{lif_forward.1} parent=27 // pred_fallthru
                _
              // Predicated region
              $region51: #{lif_forward.1} parent=27 // pred_check
                _
              $region52: #{lif_forward.1} parent=27 // pred_check_branch
                %148 = sbr.rel target = $region54
              $region53: #{lif_forward.1} parent=27 // pred_region
                _
              $region54: #{lif_forward.1} parent=27 // pred_fallthru
                _
            $region28: #{lif_forward.1} parent=23 // pred_fallthru
              _
            // Predicated region
            $region29: #{lif_forward.1} parent=23 // pred_check
              _
            $region30: #{lif_forward.1} parent=23 // pred_check_branch
              %111 = sbr.rel target = $region32
            $region31: #{lif_forward.1} parent=23 // pred_region
              loop: start=0, step=1, limit=1
              $region33: #{lif_forward.1} parent=31 // loop_pre_header
                _
              $region34: #{lif_forward.1} parent=31 // loop_header
                %s114 = sphi 0, %s118
                %p115 = scmp.ge.s32.totalorder %s114, 1
                %s119 = sphi %s105, %s105
                %s120 = sphi %s100, %s100
              $region35: #{lif_forward.1} parent=31 // loop_header_branch
                %117 = sbr.rel (%p115) target = $region39
              $region36: #{lif_forward.1} parent=31 // loop_body
                %v121 = vld [vmem:[%s119] sm:$0xff]
                %122 = vst [vmem:[%s120] sm:$0xff] %v121
                %v123 = vld [vmem:[%s119 + $0x10] sm:$0xff]
                %124 = vst [vmem:[%s120 + $0x8] sm:$0xff] %v123
                %v125 = vld [vmem:[%s119 + $0x20] sm:$0xff]
                %126 = vst [vmem:[%s120 + $0x10] sm:$0xff] %v125
                %v127 = vld [vmem:[%s119 + $0x30] sm:$0xff]
                %128 = vst [vmem:[%s120 + $0x18] sm:$0xff] %v127
              $region37: #{lif_forward.1} parent=31 // loop_footer
                %s118 = sadd.s32 1, %s114
              $region38: #{lif_forward.1} parent=31 // loop_footer_branch
                %113 = sbr.rel target = $region34
              $region39: #{lif_forward.1} parent=31 // loop_exit
                _
            $region32: #{lif_forward.1} parent=23 // pred_fallthru
              _
          $region24: #{lif_forward.1} parent=19 // pred_fallthru
            _
          %149 = vnop
        $region20: #{lif_forward.1} parent=15 // pred_fallthru
          _
      $region16: #{lif_forward.1} parent=5 // pred_fallthru
        _
      %p150 = scmp.le.s32.totalorder 1, %s7
      %p151 = scmp.lt.s32.totalorder %s7, 3
      %p152 = pnand %p150, %p151
      %p153 = pneg %p152
      // Predicated region
      $region55: #{lif_forward.1} parent=5 // pred_check
        _
      $region56: #{lif_forward.1} parent=5 // pred_check_branch
        %155 = sbr.rel (%p152) target = $region58
      $region57: #{lif_forward.1} parent=5 // pred_region
        %s156 = ssub.s32 %s7, 1
        %s157 = sand.u32 %s34, 1
        %s158 = sand.u32 %s34, 1
        %s159 = smul.addr %s158, 32
        %s160 = scalar_lea.vmem [#allocation3], %s159
        // Predicated region
        $region59: #{lif_forward.1} parent=57 // pred_check
          %p161 = pneg %p47
        $region60: #{lif_forward.1} parent=57 // pred_check_branch
          %163 = sbr.rel (%p161) target = $region62
        $region61: #{lif_forward.1} parent=57 // pred_region
          _
        $region62: #{lif_forward.1} parent=57 // pred_fallthru
          _
        %s164 = sand.u32 %s34, 1
        %s165 = sand.u32 %s34, 1
        %s166 = smul.addr %s165, 32
        %s167 = scalar_lea.vmem [#allocation3], %s166
        %p168 = pneg %p47
        %p169 = pneg %p44
        %p170 = pneg %p75
        %p171 = pneg %p72
        %s172 = sand.u32 %s62, 1
        %s173 = sand.u32 %s62, 1
        %s174 = smul.addr %s173, 32
        %s175 = scalar_lea.vmem [#allocation4], %s174
        %s176 = smul.u32 4, %s17
        %s177 = smul.u32 4, %s17
        %p178 = scmp.eq.s32.totalorder %s17, 0
        // Predicated region
        $region63: #{lif_forward.1} parent=57 // pred_check
          %p179 = pneg %p178
        $region64: #{lif_forward.1} parent=57 // pred_check_branch
          %181 = sbr.rel (%p179) target = $region66
        $region65: #{lif_forward.1} parent=57 // pred_region
          %182 = vst [vmem:[#allocation2] sm:$0xff] 0.0
        $region66: #{lif_forward.1} parent=57 // pred_fallthru
          _
        %v183 = vld [vmem:[#allocation2] sm:$0xff]
        %v184 = vld [vmem:[%s160] sm:$0xff]
        %v185 = vsub.f32 %v184, %v183
        %v186 = vmul.f32 %v185, 0.5
        %v187 = vadd.f32 %v183, %v186
        %vm188 = vcmp.ge.f32.partialorder %v187, 1.0
        %v189 = vsel %vm188, 1, 0
        %v190 = vcvt.s32.f32 %v189
        %191 = vst [vmem:[%s175] sm:$0xff] %v190
        %v192 = vsel %vm188, 0.0, %v187
        %s193 = scalar_lea.vmem %s160, 8 [#allocation3]
        %v194 = vld [vmem:[%s193] sm:$0xff]
        %v195 = vsub.f32 %v194, %v192
        %v196 = vmul.f32 %v195, 0.5
        %v197 = vadd.f32 %v192, %v196
        %vm198 = vcmp.ge.f32.partialorder %v197, 1.0
        %v199 = vsel %vm198, 1, 0
        %v200 = vcvt.s32.f32 %v199
        %s201 = scalar_lea.vmem %s175, 8 [#allocation4]
        %202 = vst [vmem:[%s201] sm:$0xff] %v200
        %v203 = vsel %vm198, 0.0, %v197
        %s204 = scalar_lea.vmem %s160, 16 [#allocation3]
        %v205 = vld [vmem:[%s204] sm:$0xff]
        %v206 = vsub.f32 %v205, %v203
        %v207 = vmul.f32 %v206, 0.5
        %v208 = vadd.f32 %v203, %v207
        %vm209 = vcmp.ge.f32.partialorder %v208, 1.0
        %v210 = vsel %vm209, 1, 0
        %v211 = vcvt.s32.f32 %v210
        %s212 = scalar_lea.vmem %s175, 16 [#allocation4]
        %213 = vst [vmem:[%s212] sm:$0xff] %v211
        %v214 = vsel %vm209, 0.0, %v208
        %s215 = scalar_lea.vmem %s160, 24 [#allocation3]
        %v216 = vld [vmem:[%s215] sm:$0xff]
        %v217 = vsub.f32 %v216, %v214
        %v218 = vmul.f32 %v217, 0.5
        %v219 = vadd.f32 %v214, %v218
        %vm220 = vcmp.ge.f32.partialorder %v219, 1.0
        %v221 = vsel %vm220, 1, 0
        %v222 = vcvt.s32.f32 %v221
        %s223 = scalar_lea.vmem %s175, 24 [#allocation4]
        %224 = vst [vmem:[%s223] sm:$0xff] %v222
        %v225 = vsel %vm220, 0.0, %v219
        %226 = vst [vmem:[#allocation2] sm:$0xff] %v225
        %s227 = sand.u32 %s62, 1
        %s228 = sand.u32 %s62, 1
        %s229 = smul.addr %s228, 32
        %s230 = scalar_lea.vmem [#allocation4], %s229
        // Predicated region
        $region67: #{lif_forward.1} parent=57 // pred_check
          %p231 = pneg %p72
        $region68: #{lif_forward.1} parent=57 // pred_check_branch
          %233 = sbr.rel (%p231) target = $region70
        $region69: #{lif_forward.1} parent=57 // pred_region
          %s234 = smul.u32 4, %s17
          %s235 = smul.addr %s234, 2
          %s236 = sadd.s32 %s16, %s235
          %s237 = smul.addr %s236, 8
          %s238 = scalar_lea.vmem %s1, %s237
          // Predicated region
          $region71: #{lif_forward.1} parent=69 // pred_check
            _
          $region72: #{lif_forward.1} parent=69 // pred_check_branch
            %240 = sbr.rel (0) target = $region74
          $region73: #{lif_forward.1} parent=69 // pred_region
            // Predicated region
            $region75: #{lif_forward.1} parent=73 // pred_check
              _
            $region76: #{lif_forward.1} parent=73 // pred_check_branch
              %242 = sbr.rel (0) target = $region78
            $region77: #{lif_forward.1} parent=73 // pred_region
              // Predicated region
              $region90: #{lif_forward.1} parent=77 // pred_check
                _
              $region91: #{lif_forward.1} parent=77 // pred_check_branch
                %263 = sbr.rel (0) target = $region93
              $region92: #{lif_forward.1} parent=77 // pred_region
                loop: start=0, step=1, limit=1
                $region94: #{lif_forward.1} parent=92 // loop_pre_header
                  _
                $region95: #{lif_forward.1} parent=92 // loop_header
                  %s265 = sphi 0, %s269
                  %p266 = scmp.ge.s32.totalorder %s265, 1
                  %s270 = sphi %s230, %s230
                  %s271 = sphi %s238, %s238
                $region96: #{lif_forward.1} parent=92 // loop_header_branch
                  %268 = sbr.rel (%p266) target = $region100
                $region97: #{lif_forward.1} parent=92 // loop_body
                  %v272 = vld [vmem:[%s270] sm:$0xff]
                  %273 = vst [vmem:[%s271] sm:$0xff] %v272
                  %v274 = vld [vmem:[%s270 + $0x8] sm:$0xff]
                  %275 = vst [vmem:[%s271 + $0x10] sm:$0xff] %v274
                  %v276 = vld [vmem:[%s270 + $0x10] sm:$0xff]
                  %277 = vst [vmem:[%s271 + $0x20] sm:$0xff] %v276
                  %v278 = vld [vmem:[%s270 + $0x18] sm:$0xff]
                  %279 = vst [vmem:[%s271 + $0x30] sm:$0xff] %v278
                $region98: #{lif_forward.1} parent=92 // loop_footer
                  %s269 = sadd.s32 1, %s265
                $region99: #{lif_forward.1} parent=92 // loop_footer_branch
                  %264 = sbr.rel target = $region95
                $region100: #{lif_forward.1} parent=92 // loop_exit
                  _
              $region93: #{lif_forward.1} parent=77 // pred_fallthru
                _
              // Predicated region
              $region101: #{lif_forward.1} parent=77 // pred_check
                _
              $region102: #{lif_forward.1} parent=77 // pred_check_branch
                %281 = sbr.rel target = $region104
              $region103: #{lif_forward.1} parent=77 // pred_region
                _
              $region104: #{lif_forward.1} parent=77 // pred_fallthru
                _
            $region78: #{lif_forward.1} parent=73 // pred_fallthru
              _
            // Predicated region
            $region79: #{lif_forward.1} parent=73 // pred_check
              _
            $region80: #{lif_forward.1} parent=73 // pred_check_branch
              %244 = sbr.rel target = $region82
            $region81: #{lif_forward.1} parent=73 // pred_region
              loop: start=0, step=1, limit=1
              $region83: #{lif_forward.1} parent=81 // loop_pre_header
                _
              $region84: #{lif_forward.1} parent=81 // loop_header
                %s247 = sphi 0, %s251
                %p248 = scmp.ge.s32.totalorder %s247, 1
                %s252 = sphi %s230, %s230
                %s253 = sphi %s238, %s238
              $region85: #{lif_forward.1} parent=81 // loop_header_branch
                %250 = sbr.rel (%p248) target = $region89
              $region86: #{lif_forward.1} parent=81 // loop_body
                %v254 = vld [vmem:[%s252] sm:$0xff]
                %255 = vst [vmem:[%s253] sm:$0xff] %v254
                %v256 = vld [vmem:[%s252 + $0x8] sm:$0xff]
                %257 = vst [vmem:[%s253 + $0x10] sm:$0xff] %v256
                %v258 = vld [vmem:[%s252 + $0x10] sm:$0xff]
                %259 = vst [vmem:[%s253 + $0x20] sm:$0xff] %v258
                %v260 = vld [vmem:[%s252 + $0x18] sm:$0xff]
                %261 = vst [vmem:[%s253 + $0x30] sm:$0xff] %v260
              $region87: #{lif_forward.1} parent=81 // loop_footer
                %s251 = sadd.s32 1, %s247
              $region88: #{lif_forward.1} parent=81 // loop_footer_branch
                %246 = sbr.rel target = $region84
              $region89: #{lif_forward.1} parent=81 // loop_exit
                _
            $region82: #{lif_forward.1} parent=73 // pred_fallthru
              _
          $region74: #{lif_forward.1} parent=69 // pred_fallthru
            _
          %282 = vnop
        $region70: #{lif_forward.1} parent=57 // pred_fallthru
          _
      $region58: #{lif_forward.1} parent=5 // pred_fallthru
        _
      %p283 = scmp.le.s32.totalorder 2, %s7
      // Predicated region
      $region105: #{lif_forward.1} parent=5 // pred_check
        %p284 = pneg %p283
      $region106: #{lif_forward.1} parent=5 // pred_check_branch
        %286 = sbr.rel (%p284) target = $region108
      $region107: #{lif_forward.1} parent=5 // pred_region
        %s287 = ssub.s32 %s7, 2
        // Predicated region
        $region109: #{lif_forward.1} parent=107 // pred_check
          %p288 = pneg %p78
        $region110: #{lif_forward.1} parent=107 // pred_check_branch
          %290 = sbr.rel (%p288) target = $region112
        $region111: #{lif_forward.1} parent=107 // pred_region
          %s291 = sand.u32 %s63, 1
          %s292 = sand.u32 %s63, 1
          %s293 = smul.addr %s292, 32
          %s294 = scalar_lea.vmem [#allocation4], %s293
        $region112: #{lif_forward.1} parent=107 // pred_fallthru
          _
      $region108: #{lif_forward.1} parent=5 // pred_fallthru
        _
    $region6: #{lif_forward.1} parent=1 // loop_footer
      %s11 = sadd.s32 1, %s7
    $region7: #{lif_forward.1} parent=1 // loop_footer_branch
      %6 = sbr.rel target = $region3
    $region8: #{lif_forward.1} parent=1 // loop_exit
      _

</llo_original>
